<compile_context>
chip_gen: v5e
topology: v5e:2x2
jax: 0.10.0
libtpu: 0.0.40
codegen_flags: <defaults>
</compile_context>

<pallas_src>
import math

import jax
import jax.numpy as jnp
from jax import lax
from jax.experimental import pallas as pl
from jax.experimental.pallas import tpu as pltpu


# ----------------------------- spectral mesh (plain JAX glue) -----------------------------
def fft_mesh_2d(n, diam):
    fx = jnp.fft.fftfreq(n, d=diam / n).astype(jnp.float32)
    kx, ky = jnp.meshgrid(fx, fx, indexing="ij")
    return kx, ky


def spectral_laplacian_2d(fft_mesh):
    kx, ky = fft_mesh
    lap = -4.0 * math.pi * math.pi * (kx ** 2 + ky ** 2)
    lap = lap.at[0, 0].set(1.0)  # matches torch: lap[..., 0, 0] = 1
    return lap.astype(jnp.float32)


# ----------------------------- Pallas kernel -----------------------------
def _helmholtz_kernel(u_ref, coef_ref, w_ref):
    # u_ref / w_ref : (TILE_B, 2, TILE_NX, F) f32, F = ny*nt*2 (interleaved re/im)
    # coef_ref      : (3, TILE_NX, F) f32  -> P, Q, R per spectral mode
    p = coef_ref[0]  # (TILE_NX, F) — loaded once, reused across the batch tile
    q = coef_ref[1]
    r = coef_ref[2]
    tb = u_ref.shape[0]

    def body(ib, carry):
        ux = u_ref[ib, 0]          # (TILE_NX, F)
        uy = u_ref[ib, 1]
        w_ref[ib, 0] = p * ux + q * uy
        w_ref[ib, 1] = q * ux + r * uy
        return carry

    lax.fori_loop(0, tb, body, 0, unroll=True if tb <= 8 else 8)


# ----------------------------- generation-aware tiling -----------------------------
def _vmem_params():
    """(tile budget bytes, vmem_limit_bytes, want >=2 grid steps for megacore)."""
    cap = 64 << 20
    try:
        info = pltpu.get_tpu_info()
        cap = int(getattr(info, "vmem_capacity_bytes", cap)) or cap
    except Exception:
        pass
    if cap >= (100 << 20):
        # v5e / v6e class parts: 128 MiB VMEM, single TensorCore -> big tiles.
        return 64 << 20, 96 << 20, False
    # v7x class: 64 MiB VMEM, 2 TensorCores -> tight accounting, multi-step grid.
    return 20 << 20, 40 << 20, True


def _pick_tiles(b, nx, F, budget_bytes, want_multi_step):
    """Pick (TILE_B, TILE_NX) so the double-buffered working set fits `budget_bytes`."""

    def cost(tb, tn):
        # double-buffered: u-in tile + u-out tile + coef tile (f32)
        return 2 * (2 * tb * 2 * tn * F * 4 + 3 * tn * F * 4)

    nx_cands = sorted({d for d in range(1, nx + 1)
                       if nx % d == 0 and (d % 8 == 0 or d == nx)}, reverse=True)
    b_cands = sorted([d for d in range(1, b + 1) if b % d == 0 and d <= 256],
                     reverse=True)

    tile_b, tile_nx = 1, min(nx_cands)
    found = False
    for tn in nx_cands:
        for tb in b_cands:
            if cost(tb, tn) <= budget_bytes:
                tile_b, tile_nx = tb, tn
                found = True
                break
        if found:
            break

    # v7x: keep >=2 parallel grid steps so both TensorCores get work.
    if want_multi_step and (nx // tile_nx) * (b // tile_b) < 2:
        if b >= 2 and b % 2 == 0:
            tile_b = max(1, min(tile_b, b // 2))
        elif len(nx_cands) > 1:
            tile_nx = nx_cands[1]
    return tile_b, tile_nx


# ----------------------------- wrapper -----------------------------
def helmholtz_forward(uhat, diam=2.0 * math.pi):
    """uhat: (b, 2, nx, ny, nt) complex64 -> (b, 2, nx, ny, nt) complex64."""
    b, two, nx, ny, nt = uhat.shape
    assert two == 2
    F = ny * nt * 2  # lane-dense trailing axis (ny, nt, re/im flattened)

    # ---- real per-mode projection coefficients ----
    # wx = P*ux + Q*uy, wy = Q*ux + R*uy with P = 1 - kx^2/k2, Q = -kx*ky/k2,
    # R = 1 - ky^2/k2, k2 = kx^2 + ky^2 (k2[0,0] := 1).  Algebraically identical to
    # u - grad(div u)/lap (the 2*pi*i / -4*pi^2 factors cancel); at the DC mode
    # kx = ky = 0 so P = R = 1, Q = 0, matching lap[0,0] = 1 in the reference.
    kx, ky = fft_mesh_2d(nx, diam)
    k2 = kx * kx + ky * ky
    k2 = k2.at[0, 0].set(1.0)
    inv_k2 = 1.0 / k2
    P = 1.0 - kx * kx * inv_k2
    Q = -kx * ky * inv_k2
    R = 1.0 - ky * ky * inv_k2
    pqr = jnp.stack([P, Q, R], axis=0).astype(jnp.float32)   # (3, nx, ny)
    pqr = jnp.repeat(pqr, nt * 2, axis=-1)                   # (3, nx, F): matches (ny, nt, re/im)
    # TODO(synk): for very large (ny, nt) a (3, nx, ny) coef block with an in-kernel
    #             broadcast would trade this HBM expansion for an in-kernel relayout.

    # ---- interleaved re/im, lane-dense trailing axis: (b, 2, nx, F) ----
    # (lax.bitcast_convert_type rejects complex dtypes, so this is one fused XLA pass.)
    u_flat = jnp.stack(
        [jnp.real(uhat).astype(jnp.float32), jnp.imag(uhat).astype(jnp.float32)],
        axis=-1,
    ).reshape(b, 2, nx, F)

    # ---- pad trailing axis to a multiple of 128 lanes (unmasked vst) ----
    F_pad = ((F + 127) // 128) * 128
    if F_pad != F:
        u_flat = jnp.pad(u_flat, ((0, 0), (0, 0), (0, 0), (0, F_pad - F)))
        pqr = jnp.pad(pqr, ((0, 0), (0, 0), (0, F_pad - F)))

    budget, vmem_limit, want_multi = _vmem_params()
    tile_b, tile_nx = _pick_tiles(b, nx, F_pad, budget, want_multi)

    # Grid = (nx tiles, batch tiles): batch is the innermost axis, so the coefficient
    # block index is unchanged across consecutive steps and Pallas skips its DMA.
    u_spec = pl.BlockSpec((tile_b, 2, tile_nx, F_pad), lambda j, i: (i, 0, j, 0))
    c_spec = pl.BlockSpec((3, tile_nx, F_pad), lambda j, i: (0, j, 0))

    w_flat = pl.pallas_call(
        _helmholtz_kernel,
        out_shape=jax.ShapeDtypeStruct((b, 2, nx, F_pad), jnp.float32),
        grid_spec=pltpu.PrefetchScalarGridSpec(
            num_scalar_prefetch=0,
            grid=(nx // tile_nx, b // tile_b),
            in_specs=[u_spec, c_spec],
            out_specs=u_spec,
        ),
        # u_flat is a wrapper-local temporary -> safe to reuse its HBM buffer for the output.
        input_output_aliases={0: 0},
        compiler_params=pltpu.CompilerParams(
            dimension_semantics=("parallel", "parallel"),
            vmem_limit_bytes=vmem_limit,
        ),
    )(u_flat, pqr)

    if F_pad != F:
        w_flat = w_flat[..., :F]
    w_ri = w_flat.reshape(b, 2, nx, ny, nt, 2)
    return lax.complex(w_ri[..., 0], w_ri[..., 1]).astype(jnp.complex64)


# ----------------------------- pure-JAX reference (for verification) -----------------------------
def helmholtz_ref(uhat, diam=2.0 * math.pi):
    b, _, nx, ny, nt = uhat.shape
    kx, ky = fft_mesh_2d(nx, diam)
    lap = spectral_laplacian_2d((kx, ky))
    kxb = kx[None, :, :, None]
    kyb = ky[None, :, :, None]
    div_u = 2j * math.pi * (kxb * uhat[:, 0] + kyb * uhat[:, 1])
    grad_div_u = jnp.stack(
        [2j * math.pi * kxb * div_u, 2j * math.pi * kyb * div_u], axis=1
    )
    lapb = lap[None, None, :, :, None]
    return uhat - grad_div_u / lapb


if __name__ == "__main__":
    # Small shapes: batch=2, 2 velocity components, nx=ny=16 grid, nt (rfft time) = 8.
    b, nx, ny, nt = 2, 16, 16, 8
    key = jax.random.PRNGKey(0)
    k_re, k_im = jax.random.split(key)
    uhat = (
        jax.random.normal(k_re, (b, 2, nx, ny, nt), dtype=jnp.float32)
        + 1j * jax.random.normal(k_im, (b, 2, nx, ny, nt), dtype=jnp.float32)
    ).astype(jnp.complex64)

    w_hat = jax.jit(helmholtz_forward)(uhat)
    w_hat = jax.block_until_ready(w_hat)

    w_ref = helmholtz_ref(uhat)
    assert jnp.allclose(w_hat, w_ref, atol=1e-4, rtol=1e-4), "mismatch vs reference"

    print("KERNEL_OK")
</pallas_src>

<mosaic_0001>
module attributes {stable_mosaic.version = 11 : i64} {
  func.func @_helmholtz_kernel(%arg0: i32, %arg1: i32, %arg2: memref<1x2x16x256xf32, #tpu.memory_space<vmem>>, %arg3: memref<3x16x256xf32, #tpu.memory_space<vmem>>, %arg4: memref<1x2x16x256xf32, #tpu.memory_space<vmem>>) attributes {dimension_semantics = [#tpu.dimension_semantics<parallel>, #tpu.dimension_semantics<parallel>], iteration_bounds = array<i64: 1, 2>, scalar_prefetch = 0 : i64, scratch_operands = 0 : i64, tpu.core_type = #tpu.core_type<tc>, window_params = [{transform_indices = @transform_0, window_bounds = array<i64: 1, 2, 16, 256>}, {transform_indices = @transform_1, window_bounds = array<i64: 3, 16, 256>}, {transform_indices = @transform_2, window_bounds = array<i64: 1, 2, 16, 256>}]} {
    %c0 = arith.constant 0 : index
    %c0_0 = arith.constant 0 : index
    %c0_1 = arith.constant 0 : index
    %0 = vector.load %arg3[%c0, %c0_0, %c0_1] : memref<3x16x256xf32, #tpu.memory_space<vmem>>, vector<1x16x256xf32>
    %1 = vector.shape_cast %0 : vector<1x16x256xf32> to vector<16x256xf32>
    %c1 = arith.constant 1 : index
    %c0_2 = arith.constant 0 : index
    %c0_3 = arith.constant 0 : index
    %2 = vector.load %arg3[%c1, %c0_2, %c0_3] : memref<3x16x256xf32, #tpu.memory_space<vmem>>, vector<1x16x256xf32>
    %3 = vector.shape_cast %2 : vector<1x16x256xf32> to vector<16x256xf32>
    %c2 = arith.constant 2 : index
    %c0_4 = arith.constant 0 : index
    %c0_5 = arith.constant 0 : index
    %4 = vector.load %arg3[%c2, %c0_4, %c0_5] : memref<3x16x256xf32, #tpu.memory_space<vmem>>, vector<1x16x256xf32>
    %5 = vector.shape_cast %4 : vector<1x16x256xf32> to vector<16x256xf32>
    %c0_i32 = arith.constant 0 : i32
    %6 = arith.index_cast %c0_i32 : i32 to index
    %c0_6 = arith.constant 0 : index
    %c0_7 = arith.constant 0 : index
    %c0_8 = arith.constant 0 : index
    %7 = vector.load %arg2[%6, %c0_6, %c0_7, %c0_8] : memref<1x2x16x256xf32, #tpu.memory_space<vmem>>, vector<1x1x16x256xf32>
    %8 = vector.shape_cast %7 : vector<1x1x16x256xf32> to vector<16x256xf32>
    %9 = arith.index_cast %c0_i32 : i32 to index
    %c1_9 = arith.constant 1 : index
    %c0_10 = arith.constant 0 : index
    %c0_11 = arith.constant 0 : index
    %10 = vector.load %arg2[%9, %c1_9, %c0_10, %c0_11] : memref<1x2x16x256xf32, #tpu.memory_space<vmem>>, vector<1x1x16x256xf32>
    %11 = vector.shape_cast %10 : vector<1x1x16x256xf32> to vector<16x256xf32>
    %12 = arith.mulf %1, %8 : vector<16x256xf32>
    %13 = arith.mulf %3, %11 : vector<16x256xf32>
    %14 = arith.addf %12, %13 : vector<16x256xf32>
    %15 = arith.index_cast %c0_i32 : i32 to index
    %c0_12 = arith.constant 0 : index
    %c0_13 = arith.constant 0 : index
    %c0_14 = arith.constant 0 : index
    %16 = vector.load %arg4[%15, %c0_12, %c0_13, %c0_14] : memref<1x2x16x256xf32, #tpu.memory_space<vmem>>, vector<1x1x16x256xf32>
    %17 = vector.shape_cast %16 : vector<1x1x16x256xf32> to vector<16x256xf32>
    %18 = vector.shape_cast %14 : vector<16x256xf32> to vector<1x1x16x256xf32>
    tpu.vector_store %arg4[%15, %c0_12, %c0_13, %c0_14], %18 {strides = array<i32>} : memref<1x2x16x256xf32, #tpu.memory_space<vmem>>, vector<1x1x16x256xf32>,
    %19 = arith.mulf %3, %8 : vector<16x256xf32>
    %20 = arith.mulf %5, %11 : vector<16x256xf32>
    %21 = arith.addf %19, %20 : vector<16x256xf32>
    %22 = arith.index_cast %c0_i32 : i32 to index
    %c1_15 = arith.constant 1 : index
    %c0_16 = arith.constant 0 : index
    %c0_17 = arith.constant 0 : index
    %23 = vector.load %arg4[%22, %c1_15, %c0_16, %c0_17] : memref<1x2x16x256xf32, #tpu.memory_space<vmem>>, vector<1x1x16x256xf32>
    %24 = vector.shape_cast %23 : vector<1x1x16x256xf32> to vector<16x256xf32>
    %25 = vector.shape_cast %21 : vector<16x256xf32> to vector<1x1x16x256xf32>
    tpu.vector_store %arg4[%22, %c1_15, %c0_16, %c0_17], %25 {strides = array<i32>} : memref<1x2x16x256xf32, #tpu.memory_space<vmem>>, vector<1x1x16x256xf32>,
    %c1_i32 = arith.constant 1 : i32
    return
  }
  func.func @transform_0(%arg0: i32, %arg1: i32) -> (i32, i32, i32, i32) {
    %c0_i32 = arith.constant 0 : i32
    %c0_i32_0 = arith.constant 0 : i32
    %c0_i32_1 = arith.constant 0 : i32
    return %arg1, %c0_i32, %arg0, %c0_i32_0 : i32, i32, i32, i32
  }
  func.func @transform_1(%arg0: i32, %arg1: i32) -> (i32, i32, i32) {
    %c0_i32 = arith.constant 0 : i32
    %c0_i32_0 = arith.constant 0 : i32
    %c0_i32_1 = arith.constant 0 : i32
    return %c0_i32, %arg0, %c0_i32_0 : i32, i32, i32
  }
  func.func @transform_2(%arg0: i32, %arg1: i32) -> (i32, i32, i32, i32) {
    %c0_i32 = arith.constant 0 : i32
    %c0_i32_0 = arith.constant 0 : i32
    %c0_i32_1 = arith.constant 0 : i32
    return %arg1, %c0_i32, %arg0, %c0_i32_0 : i32, i32, i32, i32
  }
}

</mosaic_0001>

<llo_original>
// kernel: custom-call
$region0: #{custom-call}
  %s0 = inlined_call_operand.hbm [shape: c64[2,2,16,16,8], index: 0, kind: input, shape index: {}]
  %s1 = inlined_call_operand.vmem [shape: f32[2,2,16,16,8], index: 1, kind: output, shape index: {}]
  $region1: #{custom-call} parent=0
    #allocation0 [shape = 's32[1]{0}', space=sflag, size = 0x4, scoped, tag = 'scoped memory for custom-call']
    %2 = vsyncpa [#allocation0], 0
    %s4 = sshll.u32 %s0, 4
    %s5 = int_to_ptr.hbm [resolvable:$true] %s4
    %s6 = sshll.u32 %s1, 4
    %s7 = int_to_ptr.vmem [resolvable:$true] %s6
    %9 = dma.hbm_to_vmem [thread:$0]  %s5, 8192, %s7, [#allocation0]
    %11 = dma.done [#allocation0], 8192
    %12 = vsyncpa [#allocation0], 1

// kernel: custom-call.1
$region0: #{custom-call.1}
  %s0 = inlined_call_operand.hbm [shape: c64[2,2,16,16,8], index: 0, kind: input, shape index: {}]
  %s1 = inlined_call_operand.vmem [shape: f32[2,2,16,16,8], index: 1, kind: output, shape index: {}]
  %s2 = scalar_lea.hbm %s0, 512
  $region1: #{custom-call.1} parent=0
    #allocation0 [shape = 's32[1]{0}', space=sflag, size = 0x4, scoped, tag = 'scoped memory for custom-call.1']
    %3 = vsyncpa [#allocation0], 0
    %s5 = sshll.u32 %s2, 4
    %s6 = int_to_ptr.hbm [resolvable:$true] %s5
    %s7 = sshll.u32 %s1, 4
    %s8 = int_to_ptr.vmem [resolvable:$true] %s7
    %10 = dma.hbm_to_vmem [thread:$0]  %s6, 8192, %s8, [#allocation0]
    %12 = dma.done [#allocation0], 8192
    %13 = vsyncpa [#allocation0], 1

// kernel: custom-call.2
$region0: #{custom-call.2}
  %s0 = inlined_call_operand.vmem [shape: f32[2,2,16,16,8], index: 0, kind: input, shape index: {}]
  %s1 = inlined_call_operand.vmem [shape: f32[2,2,16,16,8], index: 1, kind: input, shape index: {}]
  %s2 = inlined_call_operand.vmem [shape: c64[2,2,16,16,8], index: 2, kind: output, shape index: {}]
  %s3 = scalar_lea.vmem %s2, 512
  %v4 = vld [vmem:[%s0] sm:$0xff]
  %5 = vst [vmem:[%s2] sm:$0xff] %v4
  %s6 = scalar_lea.vmem %s2, 8
  %s7 = scalar_lea.vmem %s0, 8
  %v8 = vld [vmem:[%s7] sm:$0xff]
  %9 = vst [vmem:[%s6] sm:$0xff] %v8
  %s10 = scalar_lea.vmem %s2, 16
  %s11 = scalar_lea.vmem %s0, 16
  %v12 = vld [vmem:[%s11] sm:$0xff]
  %13 = vst [vmem:[%s10] sm:$0xff] %v12
  %s14 = scalar_lea.vmem %s2, 24
  %s15 = scalar_lea.vmem %s0, 24
  %v16 = vld [vmem:[%s15] sm:$0xff]
  %17 = vst [vmem:[%s14] sm:$0xff] %v16
  %s18 = scalar_lea.vmem %s2, 32
  %s19 = scalar_lea.vmem %s0, 32
  %v20 = vld [vmem:[%s19] sm:$0xff]
  %21 = vst [vmem:[%s18] sm:$0xff] %v20
  %s22 = scalar_lea.vmem %s2, 40
  %s23 = scalar_lea.vmem %s0, 40
  %v24 = vld [vmem:[%s23] sm:$0xff]
  %25 = vst [vmem:[%s22] sm:$0xff] %v24
  %s26 = scalar_lea.vmem %s2, 48
  %s27 = scalar_lea.vmem %s0, 48
  %v28 = vld [vmem:[%s27] sm:$0xff]
  %29 = vst [vmem:[%s26] sm:$0xff] %v28
  %s30 = scalar_lea.vmem %s2, 56
  %s31 = scalar_lea.vmem %s0, 56
  %v32 = vld [vmem:[%s31] sm:$0xff]
  %33 = vst [vmem:[%s30] sm:$0xff] %v32
  %s34 = scalar_lea.vmem %s2, 64
  %s35 = scalar_lea.vmem %s0, 64
  %v36 = vld [vmem:[%s35] sm:$0xff]
  %37 = vst [vmem:[%s34] sm:$0xff] %v36
  %s38 = scalar_lea.vmem %s2, 72
  %s39 = scalar_lea.vmem %s0, 72
  %v40 = vld [vmem:[%s39] sm:$0xff]
  %41 = vst [vmem:[%s38] sm:$0xff] %v40
  %s42 = scalar_lea.vmem %s2, 80
  %s43 = scalar_lea.vmem %s0, 80
  %v44 = vld [vmem:[%s43] sm:$0xff]
  %45 = vst [vmem:[%s42] sm:$0xff] %v44
  %s46 = scalar_lea.vmem %s2, 88
  %s47 = scalar_lea.vmem %s0, 88
  %v48 = vld [vmem:[%s47] sm:$0xff]
  %49 = vst [vmem:[%s46] sm:$0xff] %v48
  %s50 = scalar_lea.vmem %s2, 96
  %s51 = scalar_lea.vmem %s0, 96
  %v52 = vld [vmem:[%s51] sm:$0xff]
  %53 = vst [vmem:[%s50] sm:$0xff] %v52
  %s54 = scalar_lea.vmem %s2, 104
  %s55 = scalar_lea.vmem %s0, 104
  %v56 = vld [vmem:[%s55] sm:$0xff]
  %57 = vst [vmem:[%s54] sm:$0xff] %v56
  %s58 = scalar_lea.vmem %s2, 112
  %s59 = scalar_lea.vmem %s0, 112
  %v60 = vld [vmem:[%s59] sm:$0xff]
  %61 = vst [vmem:[%s58] sm:$0xff] %v60
  %s62 = scalar_lea.vmem %s2, 120
  %s63 = scalar_lea.vmem %s0, 120
  %v64 = vld [vmem:[%s63] sm:$0xff]
  %65 = vst [vmem:[%s62] sm:$0xff] %v64
  %s66 = scalar_lea.vmem %s2, 128
  %s67 = scalar_lea.vmem %s0, 128
  %v68 = vld [vmem:[%s67] sm:$0xff]
  %69 = vst [vmem:[%s66] sm:$0xff] %v68
  %s70 = scalar_lea.vmem %s2, 136
  %s71 = scalar_lea.vmem %s0, 136
  %v72 = vld [vmem:[%s71] sm:$0xff]
  %73 = vst [vmem:[%s70] sm:$0xff] %v72
  %s74 = scalar_lea.vmem %s2, 144
  %s75 = scalar_lea.vmem %s0, 144
  %v76 = vld [vmem:[%s75] sm:$0xff]
  %77 = vst [vmem:[%s74] sm:$0xff] %v76
  %s78 = scalar_lea.vmem %s2, 152
  %s79 = scalar_lea.vmem %s0, 152
  %v80 = vld [vmem:[%s79] sm:$0xff]
  %81 = vst [vmem:[%s78] sm:$0xff] %v80
  %s82 = scalar_lea.vmem %s2, 160
  %s83 = scalar_lea.vmem %s0, 160
  %v84 = vld [vmem:[%s83] sm:$0xff]
  %85 = vst [vmem:[%s82] sm:$0xff] %v84
  %s86 = scalar_lea.vmem %s2, 168
  %s87 = scalar_lea.vmem %s0, 168
  %v88 = vld [vmem:[%s87] sm:$0xff]
  %89 = vst [vmem:[%s86] sm:$0xff] %v88
  %s90 = scalar_lea.vmem %s2, 176
  %s91 = scalar_lea.vmem %s0, 176
  %v92 = vld [vmem:[%s91] sm:$0xff]
  %93 = vst [vmem:[%s90] sm:$0xff] %v92
  %s94 = scalar_lea.vmem %s2, 184
  %s95 = scalar_lea.vmem %s0, 184
  %v96 = vld [vmem:[%s95] sm:$0xff]
  %97 = vst [vmem:[%s94] sm:$0xff] %v96
  %s98 = scalar_lea.vmem %s2, 192
  %s99 = scalar_lea.vmem %s0, 192
  %v100 = vld [vmem:[%s99] sm:$0xff]
  %101 = vst [vmem:[%s98] sm:$0xff] %v100
  %s102 = scalar_lea.vmem %s2, 200
  %s103 = scalar_lea.vmem %s0, 200
  %v104 = vld [vmem:[%s103] sm:$0xff]
  %105 = vst [vmem:[%s102] sm:$0xff] %v104
  %s106 = scalar_lea.vmem %s2, 208
  %s107 = scalar_lea.vmem %s0, 208
  %v108 = vld [vmem:[%s107] sm:$0xff]
  %109 = vst [vmem:[%s106] sm:$0xff] %v108
  %s110 = scalar_lea.vmem %s2, 216
  %s111 = scalar_lea.vmem %s0, 216
  %v112 = vld [vmem:[%s111] sm:$0xff]
  %113 = vst [vmem:[%s110] sm:$0xff] %v112
  %s114 = scalar_lea.vmem %s2, 224
  %s115 = scalar_lea.vmem %s0, 224
  %v116 = vld [vmem:[%s115] sm:$0xff]
  %117 = vst [vmem:[%s114] sm:$0xff] %v116
  %s118 = scalar_lea.vmem %s2, 232
  %s119 = scalar_lea.vmem %s0, 232
  %v120 = vld [vmem:[%s119] sm:$0xff]
  %121 = vst [vmem:[%s118] sm:$0xff] %v120
  %s122 = scalar_lea.vmem %s2, 240
  %s123 = scalar_lea.vmem %s0, 240
  %v124 = vld [vmem:[%s123] sm:$0xff]
  %125 = vst [vmem:[%s122] sm:$0xff] %v124
  %s126 = scalar_lea.vmem %s2, 248
  %s127 = scalar_lea.vmem %s0, 248
  %v128 = vld [vmem:[%s127] sm:$0xff]
  %129 = vst [vmem:[%s126] sm:$0xff] %v128
  %s130 = scalar_lea.vmem %s2, 256
  %s131 = scalar_lea.vmem %s0, 256
  %v132 = vld [vmem:[%s131] sm:$0xff]
  %133 = vst [vmem:[%s130] sm:$0xff] %v132
  %s134 = scalar_lea.vmem %s2, 264
  %s135 = scalar_lea.vmem %s0, 264
  %v136 = vld [vmem:[%s135] sm:$0xff]
  %137 = vst [vmem:[%s134] sm:$0xff] %v136
  %s138 = scalar_lea.vmem %s2, 272
  %s139 = scalar_lea.vmem %s0, 272
  %v140 = vld [vmem:[%s139] sm:$0xff]
  %141 = vst [vmem:[%s138] sm:$0xff] %v140
  %s142 = scalar_lea.vmem %s2, 280
  %s143 = scalar_lea.vmem %s0, 280
  %v144 = vld [vmem:[%s143] sm:$0xff]
  %145 = vst [vmem:[%s142] sm:$0xff] %v144
  %s146 = scalar_lea.vmem %s2, 288
  %s147 = scalar_lea.vmem %s0, 288
  %v148 = vld [vmem:[%s147] sm:$0xff]
  %149 = vst [vmem:[%s146] sm:$0xff] %v148
  %s150 = scalar_lea.vmem %s2, 296
  %s151 = scalar_lea.vmem %s0, 296
  %v152 = vld [vmem:[%s151] sm:$0xff]
  %153 = vst [vmem:[%s150] sm:$0xff] %v152
  %s154 = scalar_lea.vmem %s2, 304
  %s155 = scalar_lea.vmem %s0, 304
  %v156 = vld [vmem:[%s155] sm:$0xff]
  %157 = vst [vmem:[%s154] sm:$0xff] %v156
  %s158 = scalar_lea.vmem %s2, 312
  %s159 = scalar_lea.vmem %s0, 312
  %v160 = vld [vmem:[%s159] sm:$0xff]
  %161 = vst [vmem:[%s158] sm:$0xff] %v160
  %s162 = scalar_lea.vmem %s2, 320
  %s163 = scalar_lea.vmem %s0, 320
  %v164 = vld [vmem:[%s163] sm:$0xff]
  %165 = vst [vmem:[%s162] sm:$0xff] %v164
  %s166 = scalar_lea.vmem %s2, 328
  %s167 = scalar_lea.vmem %s0, 328
  %v168 = vld [vmem:[%s167] sm:$0xff]
  %169 = vst [vmem:[%s166] sm:$0xff] %v168
  %s170 = scalar_lea.vmem %s2, 336
  %s171 = scalar_lea.vmem %s0, 336
  %v172 = vld [vmem:[%s171] sm:$0xff]
  %173 = vst [vmem:[%s170] sm:$0xff] %v172
  %s174 = scalar_lea.vmem %s2, 344
  %s175 = scalar_lea.vmem %s0, 344
  %v176 = vld [vmem:[%s175] sm:$0xff]
  %177 = vst [vmem:[%s174] sm:$0xff] %v176
  %s178 = scalar_lea.vmem %s2, 352
  %s179 = scalar_lea.vmem %s0, 352
  %v180 = vld [vmem:[%s179] sm:$0xff]
  %181 = vst [vmem:[%s178] sm:$0xff] %v180
  %s182 = scalar_lea.vmem %s2, 360
  %s183 = scalar_lea.vmem %s0, 360
  %v184 = vld [vmem:[%s183] sm:$0xff]
  %185 = vst [vmem:[%s182] sm:$0xff] %v184
  %s186 = scalar_lea.vmem %s2, 368
  %s187 = scalar_lea.vmem %s0, 368
  %v188 = vld [vmem:[%s187] sm:$0xff]
  %189 = vst [vmem:[%s186] sm:$0xff] %v188
  %s190 = scalar_lea.vmem %s2, 376
  %s191 = scalar_lea.vmem %s0, 376
  %v192 = vld [vmem:[%s191] sm:$0xff]
  %193 = vst [vmem:[%s190] sm:$0xff] %v192
  %s194 = scalar_lea.vmem %s2, 384
  %s195 = scalar_lea.vmem %s0, 384
  %v196 = vld [vmem:[%s195] sm:$0xff]
  %197 = vst [vmem:[%s194] sm:$0xff] %v196
  %s198 = scalar_lea.vmem %s2, 392
  %s199 = scalar_lea.vmem %s0, 392
  %v200 = vld [vmem:[%s199] sm:$0xff]
  %201 = vst [vmem:[%s198] sm:$0xff] %v200
  %s202 = scalar_lea.vmem %s2, 400
  %s203 = scalar_lea.vmem %s0, 400
  %v204 = vld [vmem:[%s203] sm:$0xff]
  %205 = vst [vmem:[%s202] sm:$0xff] %v204
  %s206 = scalar_lea.vmem %s2, 408
  %s207 = scalar_lea.vmem %s0, 408
  %v208 = vld [vmem:[%s207] sm:$0xff]
  %209 = vst [vmem:[%s206] sm:$0xff] %v208
  %s210 = scalar_lea.vmem %s2, 416
  %s211 = scalar_lea.vmem %s0, 416
  %v212 = vld [vmem:[%s211] sm:$0xff]
  %213 = vst [vmem:[%s210] sm:$0xff] %v212
  %s214 = scalar_lea.vmem %s2, 424
  %s215 = scalar_lea.vmem %s0, 424
  %v216 = vld [vmem:[%s215] sm:$0xff]
  %217 = vst [vmem:[%s214] sm:$0xff] %v216
  %s218 = scalar_lea.vmem %s2, 432
  %s219 = scalar_lea.vmem %s0, 432
  %v220 = vld [vmem:[%s219] sm:$0xff]
  %221 = vst [vmem:[%s218] sm:$0xff] %v220
  %s222 = scalar_lea.vmem %s2, 440
  %s223 = scalar_lea.vmem %s0, 440
  %v224 = vld [vmem:[%s223] sm:$0xff]
  %225 = vst [vmem:[%s222] sm:$0xff] %v224
  %s226 = scalar_lea.vmem %s2, 448
  %s227 = scalar_lea.vmem %s0, 448
  %v228 = vld [vmem:[%s227] sm:$0xff]
  %229 = vst [vmem:[%s226] sm:$0xff] %v228
  %s230 = scalar_lea.vmem %s2, 456
  %s231 = scalar_lea.vmem %s0, 456
  %v232 = vld [vmem:[%s231] sm:$0xff]
  %233 = vst [vmem:[%s230] sm:$0xff] %v232
  %s234 = scalar_lea.vmem %s2, 464
  %s235 = scalar_lea.vmem %s0, 464
  %v236 = vld [vmem:[%s235] sm:$0xff]
  %237 = vst [vmem:[%s234] sm:$0xff] %v236
  %s238 = scalar_lea.vmem %s2, 472
  %s239 = scalar_lea.vmem %s0, 472
  %v240 = vld [vmem:[%s239] sm:$0xff]
  %241 = vst [vmem:[%s238] sm:$0xff] %v240
  %s242 = scalar_lea.vmem %s2, 480
  %s243 = scalar_lea.vmem %s0, 480
  %v244 = vld [vmem:[%s243] sm:$0xff]
  %245 = vst [vmem:[%s242] sm:$0xff] %v244
  %s246 = scalar_lea.vmem %s2, 488
  %s247 = scalar_lea.vmem %s0, 488
  %v248 = vld [vmem:[%s247] sm:$0xff]
  %249 = vst [vmem:[%s246] sm:$0xff] %v248
  %s250 = scalar_lea.vmem %s2, 496
  %s251 = scalar_lea.vmem %s0, 496
  %v252 = vld [vmem:[%s251] sm:$0xff]
  %253 = vst [vmem:[%s250] sm:$0xff] %v252
  %s254 = scalar_lea.vmem %s2, 504
  %s255 = scalar_lea.vmem %s0, 504
  %v256 = vld [vmem:[%s255] sm:$0xff]
  %257 = vst [vmem:[%s254] sm:$0xff] %v256
  %v258 = vld [vmem:[%s1] sm:$0xff]
  %259 = vst [vmem:[%s3] sm:$0xff] %v258
  %s260 = scalar_lea.vmem %s3, 8
  %s261 = scalar_lea.vmem %s1, 8
  %v262 = vld [vmem:[%s261] sm:$0xff]
  %263 = vst [vmem:[%s260] sm:$0xff] %v262
  %s264 = scalar_lea.vmem %s3, 16
  %s265 = scalar_lea.vmem %s1, 16
  %v266 = vld [vmem:[%s265] sm:$0xff]
  %267 = vst [vmem:[%s264] sm:$0xff] %v266
  %s268 = scalar_lea.vmem %s3, 24
  %s269 = scalar_lea.vmem %s1, 24
  %v270 = vld [vmem:[%s269] sm:$0xff]
  %271 = vst [vmem:[%s268] sm:$0xff] %v270
  %s272 = scalar_lea.vmem %s3, 32
  %s273 = scalar_lea.vmem %s1, 32
  %v274 = vld [vmem:[%s273] sm:$0xff]
  %275 = vst [vmem:[%s272] sm:$0xff] %v274
  %s276 = scalar_lea.vmem %s3, 40
  %s277 = scalar_lea.vmem %s1, 40
  %v278 = vld [vmem:[%s277] sm:$0xff]
  %279 = vst [vmem:[%s276] sm:$0xff] %v278
  %s280 = scalar_lea.vmem %s3, 48
  %s281 = scalar_lea.vmem %s1, 48
  %v282 = vld [vmem:[%s281] sm:$0xff]
  %283 = vst [vmem:[%s280] sm:$0xff] %v282
  %s284 = scalar_lea.vmem %s3, 56
  %s285 = scalar_lea.vmem %s1, 56
  %v286 = vld [vmem:[%s285] sm:$0xff]
  %287 = vst [vmem:[%s284] sm:$0xff] %v286
  %s288 = scalar_lea.vmem %s3, 64
  %s289 = scalar_lea.vmem %s1, 64
  %v290 = vld [vmem:[%s289] sm:$0xff]
  %291 = vst [vmem:[%s288] sm:$0xff] %v290
  %s292 = scalar_lea.vmem %s3, 72
  %s293 = scalar_lea.vmem %s1, 72
  %v294 = vld [vmem:[%s293] sm:$0xff]
  %295 = vst [vmem:[%s292] sm:$0xff] %v294
  %s296 = scalar_lea.vmem %s3, 80
  %s297 = scalar_lea.vmem %s1, 80
  %v298 = vld [vmem:[%s297] sm:$0xff]
  %299 = vst [vmem:[%s296] sm:$0xff] %v298
  %s300 = scalar_lea.vmem %s3, 88
  %s301 = scalar_lea.vmem %s1, 88
  %v302 = vld [vmem:[%s301] sm:$0xff]
  %303 = vst [vmem:[%s300] sm:$0xff] %v302
  %s304 = scalar_lea.vmem %s3, 96
  %s305 = scalar_lea.vmem %s1, 96
  %v306 = vld [vmem:[%s305] sm:$0xff]
  %307 = vst [vmem:[%s304] sm:$0xff] %v306
  %s308 = scalar_lea.vmem %s3, 104
  %s309 = scalar_lea.vmem %s1, 104
  %v310 = vld [vmem:[%s309] sm:$0xff]
  %311 = vst [vmem:[%s308] sm:$0xff] %v310
  %s312 = scalar_lea.vmem %s3, 112
  %s313 = scalar_lea.vmem %s1, 112
  %v314 = vld [vmem:[%s313] sm:$0xff]
  %315 = vst [vmem:[%s312] sm:$0xff] %v314
  %s316 = scalar_lea.vmem %s3, 120
  %s317 = scalar_lea.vmem %s1, 120
  %v318 = vld [vmem:[%s317] sm:$0xff]
  %319 = vst [vmem:[%s316] sm:$0xff] %v318
  %s320 = scalar_lea.vmem %s3, 128
  %s321 = scalar_lea.vmem %s1, 128
  %v322 = vld [vmem:[%s321] sm:$0xff]
  %323 = vst [vmem:[%s320] sm:$0xff] %v322
  %s324 = scalar_lea.vmem %s3, 136
  %s325 = scalar_lea.vmem %s1, 136
  %v326 = vld [vmem:[%s325] sm:$0xff]
  %327 = vst [vmem:[%s324] sm:$0xff] %v326
  %s328 = scalar_lea.vmem %s3, 144
  %s329 = scalar_lea.vmem %s1, 144
  %v330 = vld [vmem:[%s329] sm:$0xff]
  %331 = vst [vmem:[%s328] sm:$0xff] %v330
  %s332 = scalar_lea.vmem %s3, 152
  %s333 = scalar_lea.vmem %s1, 152
  %v334 = vld [vmem:[%s333] sm:$0xff]
  %335 = vst [vmem:[%s332] sm:$0xff] %v334
  %s336 = scalar_lea.vmem %s3, 160
  %s337 = scalar_lea.vmem %s1, 160
  %v338 = vld [vmem:[%s337] sm:$0xff]
  %339 = vst [vmem:[%s336] sm:$0xff] %v338
  %s340 = scalar_lea.vmem %s3, 168
  %s341 = scalar_lea.vmem %s1, 168
  %v342 = vld [vmem:[%s341] sm:$0xff]
  %343 = vst [vmem:[%s340] sm:$0xff] %v342
  %s344 = scalar_lea.vmem %s3, 176
  %s345 = scalar_lea.vmem %s1, 176
  %v346 = vld [vmem:[%s345] sm:$0xff]
  %347 = vst [vmem:[%s344] sm:$0xff] %v346
  %s348 = scalar_lea.vmem %s3, 184
  %s349 = scalar_lea.vmem %s1, 184
  %v350 = vld [vmem:[%s349] sm:$0xff]
  %351 = vst [vmem:[%s348] sm:$0xff] %v350
  %s352 = scalar_lea.vmem %s3, 192
  %s353 = scalar_lea.vmem %s1, 192
  %v354 = vld [vmem:[%s353] sm:$0xff]
  %355 = vst [vmem:[%s352] sm:$0xff] %v354
  %s356 = scalar_lea.vmem %s3, 200
  %s357 = scalar_lea.vmem %s1, 200
  %v358 = vld [vmem:[%s357] sm:$0xff]
  %359 = vst [vmem:[%s356] sm:$0xff] %v358
  %s360 = scalar_lea.vmem %s3, 208
  %s361 = scalar_lea.vmem %s1, 208
  %v362 = vld [vmem:[%s361] sm:$0xff]
  %363 = vst [vmem:[%s360] sm:$0xff] %v362
  %s364 = scalar_lea.vmem %s3, 216
  %s365 = scalar_lea.vmem %s1, 216
  %v366 = vld [vmem:[%s365] sm:$0xff]
  %367 = vst [vmem:[%s364] sm:$0xff] %v366
  %s368 = scalar_lea.vmem %s3, 224
  %s369 = scalar_lea.vmem %s1, 224
  %v370 = vld [vmem:[%s369] sm:$0xff]
  %371 = vst [vmem:[%s368] sm:$0xff] %v370
  %s372 = scalar_lea.vmem %s3, 232
  %s373 = scalar_lea.vmem %s1, 232
  %v374 = vld [vmem:[%s373] sm:$0xff]
  %375 = vst [vmem:[%s372] sm:$0xff] %v374
  %s376 = scalar_lea.vmem %s3, 240
  %s377 = scalar_lea.vmem %s1, 240
  %v378 = vld [vmem:[%s377] sm:$0xff]
  %379 = vst [vmem:[%s376] sm:$0xff] %v378
  %s380 = scalar_lea.vmem %s3, 248
  %s381 = scalar_lea.vmem %s1, 248
  %v382 = vld [vmem:[%s381] sm:$0xff]
  %383 = vst [vmem:[%s380] sm:$0xff] %v382
  %s384 = scalar_lea.vmem %s3, 256
  %s385 = scalar_lea.vmem %s1, 256
  %v386 = vld [vmem:[%s385] sm:$0xff]
  %387 = vst [vmem:[%s384] sm:$0xff] %v386
  %s388 = scalar_lea.vmem %s3, 264
  %s389 = scalar_lea.vmem %s1, 264
  %v390 = vld [vmem:[%s389] sm:$0xff]
  %391 = vst [vmem:[%s388] sm:$0xff] %v390
  %s392 = scalar_lea.vmem %s3, 272
  %s393 = scalar_lea.vmem %s1, 272
  %v394 = vld [vmem:[%s393] sm:$0xff]
  %395 = vst [vmem:[%s392] sm:$0xff] %v394
  %s396 = scalar_lea.vmem %s3, 280
  %s397 = scalar_lea.vmem %s1, 280
  %v398 = vld [vmem:[%s397] sm:$0xff]
  %399 = vst [vmem:[%s396] sm:$0xff] %v398
  %s400 = scalar_lea.vmem %s3, 288
  %s401 = scalar_lea.vmem %s1, 288
  %v402 = vld [vmem:[%s401] sm:$0xff]
  %403 = vst [vmem:[%s400] sm:$0xff] %v402
  %s404 = scalar_lea.vmem %s3, 296
  %s405 = scalar_lea.vmem %s1, 296
  %v406 = vld [vmem:[%s405] sm:$0xff]
  %407 = vst [vmem:[%s404] sm:$0xff] %v406
  %s408 = scalar_lea.vmem %s3, 304
  %s409 = scalar_lea.vmem %s1, 304
  %v410 = vld [vmem:[%s409] sm:$0xff]
  %411 = vst [vmem:[%s408] sm:$0xff] %v410
  %s412 = scalar_lea.vmem %s3, 312
  %s413 = scalar_lea.vmem %s1, 312
  %v414 = vld [vmem:[%s413] sm:$0xff]
  %415 = vst [vmem:[%s412] sm:$0xff] %v414
  %s416 = scalar_lea.vmem %s3, 320
  %s417 = scalar_lea.vmem %s1, 320
  %v418 = vld [vmem:[%s417] sm:$0xff]
  %419 = vst [vmem:[%s416] sm:$0xff] %v418
  %s420 = scalar_lea.vmem %s3, 328
  %s421 = scalar_lea.vmem %s1, 328
  %v422 = vld [vmem:[%s421] sm:$0xff]
  %423 = vst [vmem:[%s420] sm:$0xff] %v422
  %s424 = scalar_lea.vmem %s3, 336
  %s425 = scalar_lea.vmem %s1, 336
  %v426 = vld [vmem:[%s425] sm:$0xff]
  %427 = vst [vmem:[%s424] sm:$0xff] %v426
  %s428 = scalar_lea.vmem %s3, 344
  %s429 = scalar_lea.vmem %s1, 344
  %v430 = vld [vmem:[%s429] sm:$0xff]
  %431 = vst [vmem:[%s428] sm:$0xff] %v430
  %s432 = scalar_lea.vmem %s3, 352
  %s433 = scalar_lea.vmem %s1, 352
  %v434 = vld [vmem:[%s433] sm:$0xff]
  %435 = vst [vmem:[%s432] sm:$0xff] %v434
  %s436 = scalar_lea.vmem %s3, 360
  %s437 = scalar_lea.vmem %s1, 360
  %v438 = vld [vmem:[%s437] sm:$0xff]
  %439 = vst [vmem:[%s436] sm:$0xff] %v438
  %s440 = scalar_lea.vmem %s3, 368
  %s441 = scalar_lea.vmem %s1, 368
  %v442 = vld [vmem:[%s441] sm:$0xff]
  %443 = vst [vmem:[%s440] sm:$0xff] %v442
  %s444 = scalar_lea.vmem %s3, 376
  %s445 = scalar_lea.vmem %s1, 376
  %v446 = vld [vmem:[%s445] sm:$0xff]
  %447 = vst [vmem:[%s444] sm:$0xff] %v446
  %s448 = scalar_lea.vmem %s3, 384
  %s449 = scalar_lea.vmem %s1, 384
  %v450 = vld [vmem:[%s449] sm:$0xff]
  %451 = vst [vmem:[%s448] sm:$0xff] %v450
  %s452 = scalar_lea.vmem %s3, 392
  %s453 = scalar_lea.vmem %s1, 392
  %v454 = vld [vmem:[%s453] sm:$0xff]
  %455 = vst [vmem:[%s452] sm:$0xff] %v454
  %s456 = scalar_lea.vmem %s3, 400
  %s457 = scalar_lea.vmem %s1, 400
  %v458 = vld [vmem:[%s457] sm:$0xff]
  %459 = vst [vmem:[%s456] sm:$0xff] %v458
  %s460 = scalar_lea.vmem %s3, 408
  %s461 = scalar_lea.vmem %s1, 408
  %v462 = vld [vmem:[%s461] sm:$0xff]
  %463 = vst [vmem:[%s460] sm:$0xff] %v462
  %s464 = scalar_lea.vmem %s3, 416
  %s465 = scalar_lea.vmem %s1, 416
  %v466 = vld [vmem:[%s465] sm:$0xff]
  %467 = vst [vmem:[%s464] sm:$0xff] %v466
  %s468 = scalar_lea.vmem %s3, 424
  %s469 = scalar_lea.vmem %s1, 424
  %v470 = vld [vmem:[%s469] sm:$0xff]
  %471 = vst [vmem:[%s468] sm:$0xff] %v470
  %s472 = scalar_lea.vmem %s3, 432
  %s473 = scalar_lea.vmem %s1, 432
  %v474 = vld [vmem:[%s473] sm:$0xff]
  %475 = vst [vmem:[%s472] sm:$0xff] %v474
  %s476 = scalar_lea.vmem %s3, 440
  %s477 = scalar_lea.vmem %s1, 440
  %v478 = vld [vmem:[%s477] sm:$0xff]
  %479 = vst [vmem:[%s476] sm:$0xff] %v478
  %s480 = scalar_lea.vmem %s3, 448
  %s481 = scalar_lea.vmem %s1, 448
  %v482 = vld [vmem:[%s481] sm:$0xff]
  %483 = vst [vmem:[%s480] sm:$0xff] %v482
  %s484 = scalar_lea.vmem %s3, 456
  %s485 = scalar_lea.vmem %s1, 456
  %v486 = vld [vmem:[%s485] sm:$0xff]
  %487 = vst [vmem:[%s484] sm:$0xff] %v486
  %s488 = scalar_lea.vmem %s3, 464
  %s489 = scalar_lea.vmem %s1, 464
  %v490 = vld [vmem:[%s489] sm:$0xff]
  %491 = vst [vmem:[%s488] sm:$0xff] %v490
  %s492 = scalar_lea.vmem %s3, 472
  %s493 = scalar_lea.vmem %s1, 472
  %v494 = vld [vmem:[%s493] sm:$0xff]
  %495 = vst [vmem:[%s492] sm:$0xff] %v494
  %s496 = scalar_lea.vmem %s3, 480
  %s497 = scalar_lea.vmem %s1, 480
  %v498 = vld [vmem:[%s497] sm:$0xff]
  %499 = vst [vmem:[%s496] sm:$0xff] %v498
  %s500 = scalar_lea.vmem %s3, 488
  %s501 = scalar_lea.vmem %s1, 488
  %v502 = vld [vmem:[%s501] sm:$0xff]
  %503 = vst [vmem:[%s500] sm:$0xff] %v502
  %s504 = scalar_lea.vmem %s3, 496
  %s505 = scalar_lea.vmem %s1, 496
  %v506 = vld [vmem:[%s505] sm:$0xff]
  %507 = vst [vmem:[%s504] sm:$0xff] %v506
  %s508 = scalar_lea.vmem %s3, 504
  %s509 = scalar_lea.vmem %s1, 504
  %v510 = vld [vmem:[%s509] sm:$0xff]
  %511 = vst [vmem:[%s508] sm:$0xff] %v510

// kernel: helmholtz_forward.1
$region0: #{helmholtz_forward.1}
  #allocation0 [shape = 'u32[]', space=smem, size = 0x4, offset = 0x4, fixed_abs, tag = 'smem constant byte address 0x4 - core index']
  #allocation1 [shape = 'u32[72,128]{1,0:T(1,128)}', space=vmem, size = 0x9000, scoped, tag = 'internal scratch']
  %s0 = inlined_call_operand.vmem [shape: f32[2,2,16,256], index: 0, kind: input, shape index: {}, may-alias: {0,2}]
  %s1 = inlined_call_operand.vmem [shape: f32[3,16,256], index: 1, kind: input, shape index: {}]
  %s2 = inlined_call_operand.vmem [shape: f32[2,2,16,256], index: 2, kind: output, shape index: {}, may-alias: {0,2}]
  %s3 = sld [smem:[#allocation0]]
  $region41: #{helmholtz_forward.1} parent=0
    _
  %s5 = ssub.s32 1, %s3
  %s6 = scalar_select 0, %s5, %s3
  loop: start=0, step=1, limit=4
  $region2: #{helmholtz_forward.1} parent=0 // loop_pre_header
    _
  $region3: #{helmholtz_forward.1} parent=0 // loop_header
    %s8 = sphi 0, %s12
    %p9 = scmp.ge.s32.totalorder %s8, 4
    %s15 = sphi 0, %s27
    %s16 = sphi 0, %s23
    %s17 = sphi 0, %s15
    %s18 = sphi 0, %s16
    %s19 = sphi 0, %s17
    %s20 = sphi 0, %s18
    %s32 = sphi 0, %s34
    %s35 = sphi 0, %s32
    %s36 = sphi 0, %s35
    %s52 = sphi 0, %s36
    %s58 = sphi 0, %s60
    %s61 = sphi 0, %s58
    %s62 = sphi 0, %s61
    %s78 = sphi 0, %s62
    %s86 = sphi 0, %s88
    %s89 = sphi 0, %s86
    %s90 = sphi 0, %s89
    %s106 = sphi 0, %s90
  $region4: #{helmholtz_forward.1} parent=0 // loop_header_branch
    %11 = sbr.rel (%p9) target = $region8
  $region5: #{helmholtz_forward.1} parent=0 // loop_body
    %s13 = ssub.s32 %s8, 1
    %s14 = ssub.s32 %s8, 2
    %s21 = sadd.s32 1, %s16
    %p22 = scmp.ge.s32.totalorder %s21, 2
    %s23 = scalar_select %p22, 0, %s21
    %s24 = sadd.s32 1, %s15
    %s25 = scalar_select %p22, %s24, %s15
    %p26 = scmp.ge.s32.totalorder %s25, 1
    %s27 = scalar_select %p26, 0, %s25
    %s28 = ssub.s32 %s16, %s23
    %s29 = ssub.s32 %s15, %s27
    %s30 = sor.u32 %s28, %s29
    %p31 = scmp.eq.s32.totalorder %s30, 0
    %s33 = sadd.s32 %s32, 1
    %s34 = scalar_select %p31, %s32, %s33
    %p37 = pneg %p31
    %p38 = scmp.eq.s32.totalorder %s8, 1
    %p39 = por %p37, %p38
    %p40 = scmp.ne.s32.totalorder %s32, %s35
    %p41 = scmp.eq.s32.totalorder %s8, 0
    %p42 = por %p40, %p41
    %p43 = scmp.ne.s32.totalorder %s32, %s35
    %p44 = scmp.eq.s32.totalorder %s13, 1
    %p45 = por %p43, %p44
    %p46 = scmp.ne.s32.totalorder %s35, %s36
    %p47 = scmp.eq.s32.totalorder %s13, 0
    %p48 = por %p46, %p47
    %p49 = scmp.ne.s32.totalorder %s35, %s36
    %p50 = scmp.eq.s32.totalorder %s14, 1
    %p51 = por %p49, %p50
    %p53 = scmp.ne.s32.totalorder %s36, %s52
    %p54 = scmp.eq.s32.totalorder %s14, 0
    %p55 = por %p53, %p54
    %s56 = ssub.s32 %s15, %s27
    %p57 = scmp.eq.s32.totalorder %s56, 0
    %s59 = sadd.s32 %s58, 1
    %s60 = scalar_select %p57, %s58, %s59
    %p63 = pneg %p57
    %p64 = scmp.eq.s32.totalorder %s8, 1
    %p65 = por %p63, %p64
    %p66 = scmp.ne.s32.totalorder %s58, %s61
    %p67 = scmp.eq.s32.totalorder %s8, 0
    %p68 = por %p66, %p67
    %p69 = scmp.ne.s32.totalorder %s58, %s61
    %p70 = scmp.eq.s32.totalorder %s13, 1
    %p71 = por %p69, %p70
    %p72 = scmp.ne.s32.totalorder %s61, %s62
    %p73 = scmp.eq.s32.totalorder %s13, 0
    %p74 = por %p72, %p73
    %p75 = scmp.ne.s32.totalorder %s61, %s62
    %p76 = scmp.eq.s32.totalorder %s14, 1
    %p77 = por %p75, %p76
    %p79 = scmp.ne.s32.totalorder %s62, %s78
    %p80 = scmp.eq.s32.totalorder %s14, 0
    %p81 = por %p79, %p80
    %s82 = ssub.s32 %s16, %s23
    %s83 = ssub.s32 %s15, %s27
    %s84 = sor.u32 %s82, %s83
    %p85 = scmp.eq.s32.totalorder %s84, 0
    %s87 = sadd.s32 %s86, 1
    %s88 = scalar_select %p85, %s86, %s87
    %p91 = pneg %p85
    %p92 = scmp.eq.s32.totalorder %s8, 1
    %p93 = por %p91, %p92
    %p94 = scmp.ne.s32.totalorder %s86, %s89
    %p95 = scmp.eq.s32.totalorder %s8, 0
    %p96 = por %p94, %p95
    %p97 = scmp.ne.s32.totalorder %s86, %s89
    %p98 = scmp.eq.s32.totalorder %s13, 1
    %p99 = por %p97, %p98
    %p100 = scmp.ne.s32.totalorder %s89, %s90
    %p101 = scmp.eq.s32.totalorder %s13, 0
    %p102 = por %p100, %p101
    %p103 = scmp.ne.s32.totalorder %s89, %s90
    %p104 = scmp.eq.s32.totalorder %s14, 1
    %p105 = por %p103, %p104
    %p107 = scmp.ne.s32.totalorder %s90, %s106
    %p108 = scmp.eq.s32.totalorder %s14, 0
    %p109 = por %p107, %p108
    %p110 = scmp.le.s32.totalorder 1, %s8
    %p111 = scmp.lt.s32.totalorder %s8, 3
    %p112 = pnand %p110, %p111
    %p113 = pneg %p112
    // Predicated region
    $region9: #{helmholtz_forward.1} parent=5 // pred_check
      _
    $region10: #{helmholtz_forward.1} parent=5 // pred_check_branch
      %115 = sbr.rel (%p112) target = $region12
    $region11: #{helmholtz_forward.1} parent=5 // pred_region
      %s116 = ssub.s32 %s8, 1
      // Predicated region
      $region13: #{helmholtz_forward.1} parent=11 // pred_check
        %p117 = pneg %p74
      $region14: #{helmholtz_forward.1} parent=11 // pred_check_branch
        %119 = sbr.rel (%p117) target = $region16
      $region15: #{helmholtz_forward.1} parent=11 // pred_region
        %s120 = smul.u32 2, %s17
        %p121 = scmp.lt.s32.totalorder %s120, 1
        %s122 = scalar_select %p121, %s120, 1
        %s123 = smul.addr %s122, 2
        %s124 = smul.addr %s123, 8
        %s125 = scalar_lea.vmem %s1, %s124
        %s126 = smul.u32 2, %s17
      $region16: #{helmholtz_forward.1} parent=11 // pred_fallthru
        _
    $region12: #{helmholtz_forward.1} parent=5 // pred_fallthru
      _
    %p127 = scmp.lt.s32.totalorder %s8, 2
    // Predicated region
    $region17: #{helmholtz_forward.1} parent=5 // pred_check
      %p128 = pneg %p127
    $region18: #{helmholtz_forward.1} parent=5 // pred_check_branch
      %130 = sbr.rel (%p128) target = $region20
    $region19: #{helmholtz_forward.1} parent=5 // pred_region
      // Predicated region
      $region21: #{helmholtz_forward.1} parent=19 // pred_check
        %p131 = pneg %p42
      $region22: #{helmholtz_forward.1} parent=19 // pred_check_branch
        %133 = sbr.rel (%p131) target = $region24
      $region23: #{helmholtz_forward.1} parent=19 // pred_region
        %s134 = smul.u32 2, %s15
        %p135 = scmp.lt.s32.totalorder %s16, 1
        %s136 = scalar_select %p135, %s16, 1
        %p137 = scmp.lt.s32.totalorder %s134, 1
        %s138 = scalar_select %p137, %s134, 1
        %s139 = smul.addr %s138, 2
        %s140 = smul.addr %s136, 8
        %s141 = sadd.s32 %s139, %s140
        %s142 = smul.addr %s141, 8
        %s143 = scalar_lea.vmem %s0, %s142
        %s144 = smul.u32 2, %s15
      $region24: #{helmholtz_forward.1} parent=19 // pred_fallthru
        _
    $region20: #{helmholtz_forward.1} parent=5 // pred_fallthru
      _
    %p145 = scmp.le.s32.totalorder 1, %s8
    %p146 = scmp.lt.s32.totalorder %s8, 3
    %p147 = pnand %p145, %p146
    %p148 = pneg %p147
    // Predicated region
    $region25: #{helmholtz_forward.1} parent=5 // pred_check
      _
    $region26: #{helmholtz_forward.1} parent=5 // pred_check_branch
      %150 = sbr.rel (%p147) target = $region28
    $region27: #{helmholtz_forward.1} parent=5 // pred_region
      %s151 = ssub.s32 %s8, 1
      %s152 = smul.u32 2, %s17
      %p153 = scmp.lt.s32.totalorder %s18, 1
      %s154 = scalar_select %p153, %s18, 1
      %p155 = scmp.lt.s32.totalorder %s152, 1
      %s156 = scalar_select %p155, %s152, 1
      %s157 = smul.addr %s156, 2
      %s158 = smul.addr %s154, 8
      %s159 = sadd.s32 %s157, %s158
      %s160 = smul.addr %s159, 8
      %s161 = scalar_lea.vmem %s0, %s160
      %p162 = pneg %p48
      %p163 = pneg %p45
      %s164 = smul.u32 2, %s17
      %p165 = scmp.lt.s32.totalorder %s164, 1
      %s166 = scalar_select %p165, %s164, 1
      %s167 = smul.addr %s166, 2
      %s168 = smul.addr %s167, 8
      %s169 = scalar_lea.vmem %s1, %s168
      %p170 = pneg %p74
      %p171 = pneg %p71
      %p172 = pneg %p102
      %p173 = pneg %p99
      %s174 = smul.u32 2, %s17
      %p175 = scmp.lt.s32.totalorder %s18, 1
      %s176 = scalar_select %p175, %s18, 1
      %p177 = scmp.lt.s32.totalorder %s174, 1
      %s178 = scalar_select %p177, %s174, 1
      %s179 = smul.addr %s178, 2
      %s180 = smul.addr %s176, 8
      %s181 = sadd.s32 %s179, %s180
      %s182 = smul.addr %s181, 8
      %s183 = scalar_lea.vmem %s2, %s182
      %s184 = smul.u32 2, %s17
      %p185 = scmp.lt.s32.totalorder %s18, 1
      %s186 = scalar_select %p185, %s18, 1
      %p187 = scmp.lt.s32.totalorder %s184, 1
      %s188 = scalar_select %p187, %s184, 1
      %s189 = smul.addr %s188, 2
      %s190 = smul.addr %s186, 8
      %s191 = sadd.s32 %s189, %s190
      %s192 = smul.addr %s191, 8
      %s193 = scalar_lea.vmem %s0, %s192
      %s194 = smul.u32 2, %s17
      %s195 = smul.u32 2, %s17
      %p196 = scmp.lt.s32.totalorder %s195, 1
      %s197 = scalar_select %p196, %s195, 1
      %s198 = smul.addr %s197, 2
      %s199 = smul.addr %s198, 8
      %s200 = scalar_lea.vmem %s1, %s199
      %s201 = smul.u32 2, %s17
      %s202 = smul.u32 2, %s17
      %p203 = scmp.lt.s32.totalorder %s18, 1
      %s204 = scalar_select %p203, %s18, 1
      %p205 = scmp.lt.s32.totalorder %s202, 1
      %s206 = scalar_select %p205, %s202, 1
      %s207 = smul.addr %s206, 2
      %s208 = smul.addr %s204, 8
      %s209 = sadd.s32 %s207, %s208
      %s210 = smul.addr %s209, 8
      %s211 = scalar_lea.vmem %s2, %s210
      %s212 = smul.u32 2, %s17
      %v213 = vld [vmem:[%s200] sm:$0xff]
      %v214 = vld [vmem:[%s200 + $0x8] sm:$0xff]
      %v215 = vld [vmem:[%s200 + $0x10] sm:$0xff]
      %v216 = vld [vmem:[%s200 + $0x18] sm:$0xff]
      %s217 = scalar_lea.vmem %s200, 32
      %v218 = vld [vmem:[%s217] sm:$0xff]
      %v219 = vld [vmem:[%s217 + $0x8] sm:$0xff]
      %v220 = vld [vmem:[%s217 + $0x10] sm:$0xff]
      %v221 = vld [vmem:[%s217 + $0x18] sm:$0xff]
      %s222 = scalar_lea.vmem %s200, 64
      %v223 = vld [vmem:[%s222] sm:$0xff]
      %v224 = vld [vmem:[%s222 + $0x8] sm:$0xff]
      %v225 = vld [vmem:[%s222 + $0x10] sm:$0xff]
      %v226 = vld [vmem:[%s222 + $0x18] sm:$0xff]
      %v227 = vld [vmem:[%s193] sm:$0xff]
      %v228 = vld [vmem:[%s193 + $0x8] sm:$0xff]
      %v229 = vld [vmem:[%s193 + $0x10] sm:$0xff]
      %v230 = vld [vmem:[%s193 + $0x18] sm:$0xff]
      %s231 = scalar_lea.vmem %s193, 32
      %v232 = vld [vmem:[%s231] sm:$0xff]
      %v233 = vld [vmem:[%s231 + $0x8] sm:$0xff]
      %v234 = vld [vmem:[%s231 + $0x10] sm:$0xff]
      %v235 = vld [vmem:[%s231 + $0x18] sm:$0xff]
      %v236 = vmul.f32 %v213, %v227
      %v237 = vmul.f32 %v214, %v228
      %v238 = vmul.f32 %v215, %v229
      %v239 = vmul.f32 %v216, %v230
      %v240 = vmul.f32 %v218, %v232
      %v241 = vmul.f32 %v219, %v233
      %v242 = vmul.f32 %v220, %v234
      %v243 = vmul.f32 %v221, %v235
      %v244 = vadd.f32 %v236, %v240
      %v245 = vadd.f32 %v237, %v241
      %v246 = vadd.f32 %v238, %v242
      %v247 = vadd.f32 %v239, %v243
      %248 = vst [vmem:[%s211] sm:$0xff] %v244
      %249 = vst [vmem:[%s211 + $0x8] sm:$0xff] %v245
      %250 = vst [vmem:[%s211 + $0x10] sm:$0xff] %v246
      %251 = vst [vmem:[%s211 + $0x18] sm:$0xff] %v247
      %v252 = vmul.f32 %v218, %v227
      %v253 = vmul.f32 %v219, %v228
      %v254 = vmul.f32 %v220, %v229
      %v255 = vmul.f32 %v221, %v230
      %v256 = vmul.f32 %v223, %v232
      %v257 = vmul.f32 %v224, %v233
      %v258 = vmul.f32 %v225, %v234
      %v259 = vmul.f32 %v226, %v235
      %v260 = vadd.f32 %v252, %v256
      %v261 = vadd.f32 %v253, %v257
      %v262 = vadd.f32 %v254, %v258
      %v263 = vadd.f32 %v255, %v259
      %s264 = scalar_lea.vmem %s211, 32
      %265 = vst [vmem:[%s264] sm:$0xff] %v260
      %266 = vst [vmem:[%s264 + $0x8] sm:$0xff] %v261
      %267 = vst [vmem:[%s264 + $0x10] sm:$0xff] %v262
      %268 = vst [vmem:[%s264 + $0x18] sm:$0xff] %v263
      %s269 = smul.u32 2, %s17
      %p270 = scmp.lt.s32.totalorder %s18, 1
      %s271 = scalar_select %p270, %s18, 1
      %p272 = scmp.lt.s32.totalorder %s269, 1
      %s273 = scalar_select %p272, %s269, 1
      %s274 = smul.addr %s273, 2
      %s275 = smul.addr %s271, 8
      %s276 = sadd.s32 %s274, %s275
      %s277 = smul.addr %s276, 8
      %s278 = scalar_lea.vmem %s2, %s277
      // Predicated region
      $region29: #{helmholtz_forward.1} parent=27 // pred_check
        %p279 = pneg %p99
      $region30: #{helmholtz_forward.1} parent=27 // pred_check_branch
        %281 = sbr.rel (%p279) target = $region32
      $region31: #{helmholtz_forward.1} parent=27 // pred_region
        %s282 = smul.u32 2, %s17
      $region32: #{helmholtz_forward.1} parent=27 // pred_fallthru
        _
    $region28: #{helmholtz_forward.1} parent=5 // pred_fallthru
      _
    %p283 = scmp.le.s32.totalorder 2, %s8
    // Predicated region
    $region33: #{helmholtz_forward.1} parent=5 // pred_check
      %p284 = pneg %p283
    $region34: #{helmholtz_forward.1} parent=5 // pred_check_branch
      %286 = sbr.rel (%p284) target = $region36
    $region35: #{helmholtz_forward.1} parent=5 // pred_region
      %s287 = ssub.s32 %s8, 2
      // Predicated region
      $region37: #{helmholtz_forward.1} parent=35 // pred_check
        %p288 = pneg %p105
      $region38: #{helmholtz_forward.1} parent=35 // pred_check_branch
        %290 = sbr.rel (%p288) target = $region40
      $region39: #{helmholtz_forward.1} parent=35 // pred_region
        %s291 = smul.u32 2, %s19
        %p292 = scmp.lt.s32.totalorder %s20, 1
        %s293 = scalar_select %p292, %s20, 1
        %p294 = scmp.lt.s32.totalorder %s291, 1
        %s295 = scalar_select %p294, %s291, 1
        %s296 = smul.addr %s295, 2
        %s297 = smul.addr %s293, 8
        %s298 = sadd.s32 %s296, %s297
        %s299 = smul.addr %s298, 8
        %s300 = scalar_lea.vmem %s2, %s299
      $region40: #{helmholtz_forward.1} parent=35 // pred_fallthru
        _
    $region36: #{helmholtz_forward.1} parent=5 // pred_fallthru
      _
  $region6: #{helmholtz_forward.1} parent=0 // loop_footer
    %s12 = sadd.s32 1, %s8
  $region7: #{helmholtz_forward.1} parent=0 // loop_footer_branch
    %7 = sbr.rel target = $region3
  $region8: #{helmholtz_forward.1} parent=0 // loop_exit
    _

</llo_original>
